<compile_context>
chip_gen: v7x
topology: tpu7x:2x2x1
jax: 0.10.0
libtpu: 0.0.40
codegen_flags: <defaults>
</compile_context>

<pallas_src>
import functools

import jax
import jax.numpy as jnp
from jax.experimental import pallas as pl
from jax.experimental.pallas import tpu as pltpu

EPS = 1e-5


# ---------------------------------------------------------------------------
# Tiling / compiler-parameter helpers
# ---------------------------------------------------------------------------
def _round_up(x, m):
    return -(-x // m) * m


def _vmem_cap_bytes():
    try:
        return int(pltpu.get_tpu_info().vmem_capacity_bytes)
    except Exception:
        return 64 << 20  # conservative: v7x per-TensorCore VMEM


def _compiler_params(step_bytes, semantics):
    cap = _vmem_cap_bytes()
    # double-buffered working set + headroom, clamped below physical VMEM
    limit = int(min(max(2 * step_bytes + (8 << 20), 16 << 20), cap - (8 << 20)))
    return pltpu.CompilerParams(dimension_semantics=semantics,
                                vmem_limit_bytes=limit)


def _select_tiles(N, L, c_in, c_out):
    """Pick (TN, TL, L_pad) from the real per-step footprint of the worst sweep."""
    cap = _vmem_cap_bytes()
    # generation-aware per-step activation-block target (single copy, in+out)
    target = (6 << 20) if cap >= (100 << 20) else (2 << 20)
    per_lane = (max(c_in, c_out) + c_out) * 4          # f32 worst case, in + out
    l_cap = _round_up(L, 128)
    tl = max(128, min((target // per_lane) // 128 * 128, l_cap))
    l_pad = _round_up(L, tl)
    # Block over batch too when tiles are small (amortize per-step overhead).
    tn = 1
    for cand in range(1, min(N, 8) + 1):
        if N % cand == 0 and cand * tl * per_lane <= target:
            tn = cand
    return tn, tl, l_pad


# ---------------------------------------------------------------------------
# Kernels
# ---------------------------------------------------------------------------
def _stats_kernel(x_ref, sum_ref, sq_ref):
    """Per-channel sum / sumsq partials of x, accumulated directly into the
    grid-resident per-batch-block outputs (L reduced here, batch blocks
    reduced in the wrapper).  Zero-padded lanes contribute nothing."""
    @pl.when(pl.program_id(1) == 0)
    def _():
        sum_ref[...] = jnp.zeros_like(sum_ref)
        sq_ref[...] = jnp.zeros_like(sq_ref)

    x = x_ref[...].astype(jnp.float32)                       # (TN, C, TL)
    s = jnp.sum(x, axis=2, keepdims=True)                    # lane (XLU) reduce
    q = jnp.sum(x * x, axis=2, keepdims=True)
    sum_ref[...] += jnp.sum(s, axis=0, keepdims=True)        # (1, C, 1)
    sq_ref[...] += jnp.sum(q, axis=0, keepdims=True)


def _make_stage_kernel(tn, tl, l_true, needs_mask, compute_dtype, act_dtype):
    """ReLU((W*s) @ x + fused_bias) per tile + masked stats of the output."""
    def kernel(x_ref, w_ref, b_ref, h_ref, sum_ref, sq_ref):
        @pl.when(pl.program_id(1) == 0)
        def _():
            sum_ref[...] = jnp.zeros_like(sum_ref)
            sq_ref[...] = jnp.zeros_like(sq_ref)

        w = w_ref[...]                                       # (Cout, Cin), pre-cast
        b = b_ref[...]                                       # (Cout, 1) f32
        if needs_mask:
            lane = jax.lax.broadcasted_iota(jnp.int32, (1, tl), 1)
            valid = (pl.program_id(1) * tl + lane) < l_true

        s_part = jnp.zeros(sum_ref.shape[1:], jnp.float32)   # (Cout, 1)
        q_part = jnp.zeros(sum_ref.shape[1:], jnp.float32)
        for i in range(tn):                                  # small static unroll
            x = x_ref[i].astype(compute_dtype)               # (Cin, TL)
            h = jnp.dot(w, x, preferred_element_type=jnp.float32)
            h = jnp.maximum(h + b, 0.0)                      # fused bias + ReLU (f32)
            h_ref[i] = h.astype(act_dtype)                   # bf16 store halves traffic
            hm = jnp.where(valid, h, 0.0) if needs_mask else h
            s_part = s_part + jnp.sum(hm, axis=1, keepdims=True)
            q_part = q_part + jnp.sum(hm * hm, axis=1, keepdims=True)
        sum_ref[0] += s_part
        sq_ref[0] += q_part

    return kernel


def _affine_kernel(x_ref, s_ref, t_ref, o_ref):
    """Final BN4 as a per-channel scale/shift (stats already folded into s,t)."""
    o_ref[...] = x_ref[...].astype(jnp.float32) * s_ref[...] + t_ref[...]


# ---------------------------------------------------------------------------
# pallas_call wrappers
# ---------------------------------------------------------------------------
def _channel_stats(x, tn, tl):
    N, C, Lp = x.shape
    gn, gl = N // tn, Lp // tl
    xb = jnp.dtype(x.dtype).itemsize
    step_bytes = tn * C * tl * xb + 2 * C * 4
    stat_spec = pl.BlockSpec((1, C, 1), lambda n, l: (n, 0, 0))
    sums, sqs = pl.pallas_call(
        _stats_kernel,
        out_shape=(jax.ShapeDtypeStruct((gn, C, 1), jnp.float32),
                   jax.ShapeDtypeStruct((gn, C, 1), jnp.float32)),
        grid=(gn, gl),
        in_specs=[pl.BlockSpec((tn, C, tl), lambda n, l: (n, 0, l))],
        out_specs=(stat_spec, stat_spec),
        compiler_params=_compiler_params(step_bytes, ("parallel", "arbitrary")),
    )(x)
    return jnp.sum(sums, axis=0), jnp.sum(sqs, axis=0)        # (C, 1) each


def _conv_stage(x, w_folded, b_fused, *, tn, tl, l_true, compute_dtype, act_dtype):
    N, C_in, Lp = x.shape
    C_out = w_folded.shape[0]
    gn, gl = N // tn, Lp // tl
    needs_mask = (Lp != l_true)
    xb = jnp.dtype(x.dtype).itemsize
    ab = jnp.dtype(act_dtype).itemsize
    wb = jnp.dtype(w_folded.dtype).itemsize
    step_bytes = tn * tl * (C_in * xb + C_out * ab) + C_out * C_in * wb + 3 * C_out * 4
    stat_spec = pl.BlockSpec((1, C_out, 1), lambda n, l: (n, 0, 0))
    h, sums, sqs = pl.pallas_call(
        _make_stage_kernel(tn, tl, l_true, needs_mask, compute_dtype, act_dtype),
        out_shape=(jax.ShapeDtypeStruct((N, C_out, Lp), act_dtype),
                   jax.ShapeDtypeStruct((gn, C_out, 1), jnp.float32),
                   jax.ShapeDtypeStruct((gn, C_out, 1), jnp.float32)),
        grid=(gn, gl),
        in_specs=[pl.BlockSpec((tn, C_in, tl), lambda n, l: (n, 0, l)),
                  pl.BlockSpec((C_out, C_in), lambda n, l: (0, 0)),
                  pl.BlockSpec((C_out, 1), lambda n, l: (0, 0))],
        out_specs=(pl.BlockSpec((tn, C_out, tl), lambda n, l: (n, 0, l)),
                   stat_spec, stat_spec),
        compiler_params=_compiler_params(step_bytes, ("parallel", "arbitrary")),
    )(x, w_folded, b_fused)
    return h, jnp.sum(sums, axis=0), jnp.sum(sqs, axis=0)


def _affine_apply(x, s, t, *, tn, tl):
    N, C, Lp = x.shape
    gn, gl = N // tn, Lp // tl
    xb = jnp.dtype(x.dtype).itemsize
    step_bytes = tn * C * tl * (xb + 4) + 2 * C * 4
    return pl.pallas_call(
        _affine_kernel,
        out_shape=jax.ShapeDtypeStruct((N, C, Lp), jnp.float32),
        grid=(gn, gl),
        in_specs=[pl.BlockSpec((tn, C, tl), lambda n, l: (n, 0, l)),
                  pl.BlockSpec((C, 1), lambda n, l: (0, 0)),
                  pl.BlockSpec((C, 1), lambda n, l: (0, 0))],
        out_specs=pl.BlockSpec((tn, C, tl), lambda n, l: (n, 0, l)),
        compiler_params=_compiler_params(step_bytes, ("parallel", "parallel")),
    )(x, s, t)


# ---------------------------------------------------------------------------
# BN folding (tiny O(C) / O(C^2) glue, runs in XLA between sweeps)
# ---------------------------------------------------------------------------
def _bn_fold(sum_, sumsq, count, gamma, beta):
    """Training-mode BN (biased one-pass var) -> per-channel scale & shift."""
    mean = sum_ / count
    var = jnp.maximum(sumsq / count - mean * mean, 0.0)
    s = gamma * jax.lax.rsqrt(var + EPS)
    t = beta - mean * s
    return s, t                                               # (C, 1), (C, 1)


def _fold_bn_into_conv(w, conv_bias, s, t):
    """conv(BN(x)) = (W * s^T) @ x + (W @ t + conv_bias)."""
    return w * s.reshape(1, -1), jnp.dot(w, t) + conv_bias


# ---------------------------------------------------------------------------
# Forward pass
# ---------------------------------------------------------------------------
def conv1d_block(x, params, *, compute_dtype=jnp.float32, act_dtype=None):
    """x: (N, C_in, L) f32 -> (N, C_out, L) f32 (PyTorch NCL layout)."""
    (g1, b1, w1, c1b, g2, b2, w2, c2b, g3, b3, w3, c3b, g4, b4) = params
    if act_dtype is None:
        act_dtype = compute_dtype
    N, C_in, L = x.shape
    C_out = w1.shape[0]
    tn, tl, l_pad = _select_tiles(N, L, C_in, C_out)
    if l_pad != L:
        x = jnp.pad(x, ((0, 0), (0, 0), (0, l_pad - L)))      # zero pad lanes
    count = jnp.float32(N * L)

    stage = functools.partial(_conv_stage, tn=tn, tl=tl, l_true=L,
                              compute_dtype=compute_dtype, act_dtype=act_dtype)

    # Sweep 0: BN1 statistics of x (zero padding contributes nothing).
    sx, qx = _channel_stats(x, tn, tl)
    s1, t1 = _bn_fold(sx, qx, count, g1, b1)
    wf1, bf1 = _fold_bn_into_conv(w1, c1b, s1, t1)

    # Sweep 1: folded BN1 + conv1 + ReLU; masked stats of h1 for BN2.
    h1, sh1, qh1 = stage(x, wf1.astype(compute_dtype), bf1)
    s2, t2 = _bn_fold(sh1, qh1, count, g2, b2)
    wf2, bf2 = _fold_bn_into_conv(w2, c2b, s2, t2)

    # Sweep 2.
    h2, sh2, qh2 = stage(h1, wf2.astype(compute_dtype), bf2)
    s3, t3 = _bn_fold(sh2, qh2, count, g3, b3)
    wf3, bf3 = _fold_bn_into_conv(w3, c3b, s3, t3)

    # Sweep 3.
    h3, sh3, qh3 = stage(h2, wf3.astype(compute_dtype), bf3)
    s4, t4 = _bn_fold(sh3, qh3, count, g4, b4)

    # Sweep 4: final BN4 as a per-channel affine; drop the L padding.
    out = _affine_apply(h3, s4, t4, tn=tn, tl=tl)
    return out[:, :, :L] if l_pad != L else out


# ---------------------------------------------------------------------------
# Parameters / reference
# ---------------------------------------------------------------------------
def init_params(key, in_channels, out_channels):
    """Deterministic synthetic parameters (shapes match the PyTorch module)."""
    ks = jax.random.split(key, 6)
    f32 = jnp.float32

    def bn_params(c):
        # PyTorch default affine init: gamma=1, beta=0
        return jnp.ones((c, 1), f32), jnp.zeros((c, 1), f32)

    g1, b1 = bn_params(in_channels)
    g2, b2 = bn_params(out_channels)
    g3, b3 = bn_params(out_channels)
    g4, b4 = bn_params(out_channels)

    # Conv1d(kernel_size=1) weight (out, in, 1) stored as (out, in); bias (out, 1)
    w1 = jax.random.normal(ks[0], (out_channels, in_channels), f32) * 0.1
    c1b = jax.random.normal(ks[1], (out_channels, 1), f32) * 0.1
    w2 = jax.random.normal(ks[2], (out_channels, out_channels), f32) * 0.1
    c2b = jax.random.normal(ks[3], (out_channels, 1), f32) * 0.1
    w3 = jax.random.normal(ks[4], (out_channels, out_channels), f32) * 0.1
    c3b = jax.random.normal(ks[5], (out_channels, 1), f32) * 0.1

    return (g1, b1, w1, c1b, g2, b2, w2, c2b, g3, b3, w3, c3b, g4, b4)


def _reference(x, params):
    # Pure-JAX reference mirroring the PyTorch training-mode forward.
    (g1, b1, w1, c1b, g2, b2, w2, c2b, g3, b3, w3, c3b, g4, b4) = params

    def bn(x, g, b):  # x: (N, C, L)
        mean = jnp.mean(x, axis=(0, 2), keepdims=True)
        var = jnp.mean((x - mean) ** 2, axis=(0, 2), keepdims=True)
        return g.reshape(1, -1, 1) * (x - mean) * jax.lax.rsqrt(var + EPS) \
            + b.reshape(1, -1, 1)

    def conv1x1(x, w, b):  # x: (N, C, L)
        return jnp.einsum("oc,ncl->nol", w, x) + b.reshape(1, -1, 1)

    h = bn(x, g1, b1)
    h = jnp.maximum(conv1x1(h, w1, c1b), 0.0)
    h = bn(h, g2, b2)
    h = jnp.maximum(conv1x1(h, w2, c2b), 0.0)
    h = bn(h, g3, b3)
    h = jnp.maximum(conv1x1(h, w3, c3b), 0.0)
    return bn(h, g4, b4)


if __name__ == "__main__":
    key = jax.random.PRNGKey(0)
    k_x, k_p = jax.random.split(key)

    N, C_in, C_out, L = 2, 4, 8, 16
    x = jax.random.normal(k_x, (N, C_in, L), jnp.float32)
    params = init_params(k_p, C_in, C_out)

    ref = _reference(x, params)

    # Default f32 path: tight parity with the PyTorch training-mode forward.
    out = jax.block_until_ready(jax.jit(conv1d_block)(x, params))
    assert out.shape == (N, C_out, L)
    assert jnp.allclose(out, ref, atol=1e-4, rtol=1e-4)

    # Bandwidth-optimized path: bf16 MXU operands + bf16 intermediate
    # activations h1..h3 (stats / bias+ReLU epilogue stay f32).
    fwd_fast = jax.jit(functools.partial(conv1d_block,
                                         compute_dtype=jnp.bfloat16,
                                         act_dtype=jnp.bfloat16))
    out_fast = jax.block_until_ready(fwd_fast(x, params))
    assert out_fast.shape == (N, C_out, L)
    assert jnp.allclose(out_fast, ref, atol=2e-1, rtol=2e-1)

    print("KERNEL_OK")
</pallas_src>

<mosaic_0001>
module attributes {stable_mosaic.version = 11 : i64} {
  func.func @_stats_kernel(%arg0: i32, %arg1: i32, %arg2: memref<2x4x128xf32, #tpu.memory_space<vmem>>, %arg3: memref<1x4x1xf32, #tpu.memory_space<vmem>>, %arg4: memref<1x4x1xf32, #tpu.memory_space<vmem>>) attributes {dimension_semantics = [#tpu.dimension_semantics<parallel>, #tpu.dimension_semantics<arbitrary>], iteration_bounds = array<i64: 1, 1>, scalar_prefetch = 0 : i64, scratch_operands = 0 : i64, tpu.core_type = #tpu.core_type<tc>, window_params = [{transform_indices = @transform_0, window_bounds = array<i64: 2, 4, 128>}, {transform_indices = @transform_1, window_bounds = array<i64: 1, 4, 1>}, {transform_indices = @transform_2, window_bounds = array<i64: 1, 4, 1>}]} {
    %c0_i32 = arith.constant 0 : i32
    %0 = arith.cmpi eq, %arg1, %c0_i32 : i32
    %1 = arith.extui %0 : i1 to i32
    %c0_i32_0 = arith.constant 0 : i32
    %2 = arith.cmpi ne, %1, %c0_i32_0 : i32
    scf.if %2 {
      %cst_18 = arith.constant 0.000000e+00 : f32
      %19 = vector.broadcast %cst_18 : f32 to vector<1x4x1xf32>
      %c0_19 = arith.constant 0 : index
      %c0_20 = arith.constant 0 : index
      %c0_21 = arith.constant 0 : index
      %20 = vector.load %arg3[%c0_19, %c0_20, %c0_21] : memref<1x4x1xf32, #tpu.memory_space<vmem>>, vector<1x4x1xf32>
      tpu.vector_store %arg3[%c0_19, %c0_20, %c0_21], %19 {strides = array<i32>} : memref<1x4x1xf32, #tpu.memory_space<vmem>>, vector<1x4x1xf32>,
      %cst_22 = arith.constant 0.000000e+00 : f32
      %21 = vector.broadcast %cst_22 : f32 to vector<1x4x1xf32>
      %c0_23 = arith.constant 0 : index
      %c0_24 = arith.constant 0 : index
      %c0_25 = arith.constant 0 : index
      %22 = vector.load %arg4[%c0_23, %c0_24, %c0_25] : memref<1x4x1xf32, #tpu.memory_space<vmem>>, vector<1x4x1xf32>
      tpu.vector_store %arg4[%c0_23, %c0_24, %c0_25], %21 {strides = array<i32>} : memref<1x4x1xf32, #tpu.memory_space<vmem>>, vector<1x4x1xf32>,
    } else {
    }
    %c0 = arith.constant 0 : index
    %c0_1 = arith.constant 0 : index
    %c0_2 = arith.constant 0 : index
    %3 = vector.load %arg2[%c0, %c0_1, %c0_2] : memref<2x4x128xf32, #tpu.memory_space<vmem>>, vector<2x4x128xf32>
    %cst = arith.constant dense<0.000000e+00> : vector<2x4xf32>
    %4 = vector.multi_reduction <add>, %3, %cst [2] : vector<2x4x128xf32> to vector<2x4xf32>
    %5 = vector.shape_cast %4 : vector<2x4xf32> to vector<2x4x1xf32>
    %6 = arith.mulf %3, %3 : vector<2x4x128xf32>
    %cst_3 = arith.constant dense<0.000000e+00> : vector<2x4xf32>
    %7 = vector.multi_reduction <add>, %6, %cst_3 [2] : vector<2x4x128xf32> to vector<2x4xf32>
    %8 = vector.shape_cast %7 : vector<2x4xf32> to vector<2x4x1xf32>
    %c0_4 = arith.constant 0 : index
    %c0_5 = arith.constant 0 : index
    %c0_6 = arith.constant 0 : index
    %9 = vector.load %arg3[%c0_4, %c0_5, %c0_6] : memref<1x4x1xf32, #tpu.memory_space<vmem>>, vector<1x4x1xf32>
    %cst_7 = arith.constant dense<0.000000e+00> : vector<4x1xf32>
    %10 = vector.multi_reduction <add>, %5, %cst_7 [0] : vector<2x4x1xf32> to vector<4x1xf32>
    %11 = vector.shape_cast %10 : vector<4x1xf32> to vector<1x4x1xf32>
    %12 = arith.addf %9, %11 : vector<1x4x1xf32>
    %c0_8 = arith.constant 0 : index
    %c0_9 = arith.constant 0 : index
    %c0_10 = arith.constant 0 : index
    %13 = vector.load %arg3[%c0_8, %c0_9, %c0_10] : memref<1x4x1xf32, #tpu.memory_space<vmem>>, vector<1x4x1xf32>
    tpu.vector_store %arg3[%c0_8, %c0_9, %c0_10], %12 {strides = array<i32>} : memref<1x4x1xf32, #tpu.memory_space<vmem>>, vector<1x4x1xf32>,
    %c0_11 = arith.constant 0 : index
    %c0_12 = arith.constant 0 : index
    %c0_13 = arith.constant 0 : index
    %14 = vector.load %arg4[%c0_11, %c0_12, %c0_13] : memref<1x4x1xf32, #tpu.memory_space<vmem>>, vector<1x4x1xf32>
    %cst_14 = arith.constant dense<0.000000e+00> : vector<4x1xf32>
    %15 = vector.multi_reduction <add>, %8, %cst_14 [0] : vector<2x4x1xf32> to vector<4x1xf32>
    %16 = vector.shape_cast %15 : vector<4x1xf32> to vector<1x4x1xf32>
    %17 = arith.addf %14, %16 : vector<1x4x1xf32>
    %c0_15 = arith.constant 0 : index
    %c0_16 = arith.constant 0 : index
    %c0_17 = arith.constant 0 : index
    %18 = vector.load %arg4[%c0_15, %c0_16, %c0_17] : memref<1x4x1xf32, #tpu.memory_space<vmem>>, vector<1x4x1xf32>
    tpu.vector_store %arg4[%c0_15, %c0_16, %c0_17], %17 {strides = array<i32>} : memref<1x4x1xf32, #tpu.memory_space<vmem>>, vector<1x4x1xf32>,
    return
  }
  func.func @transform_0(%arg0: i32, %arg1: i32) -> (i32, i32, i32) {
    %c0_i32 = arith.constant 0 : i32
    %c0_i32_0 = arith.constant 0 : i32
    return %arg0, %c0_i32, %arg1 : i32, i32, i32
  }
  func.func @transform_1(%arg0: i32, %arg1: i32) -> (i32, i32, i32) {
    %c0_i32 = arith.constant 0 : i32
    %c0_i32_0 = arith.constant 0 : i32
    %c0_i32_1 = arith.constant 0 : i32
    return %arg0, %c0_i32, %c0_i32_0 : i32, i32, i32
  }
  func.func @transform_2(%arg0: i32, %arg1: i32) -> (i32, i32, i32) {
    %c0_i32 = arith.constant 0 : i32
    %c0_i32_0 = arith.constant 0 : i32
    %c0_i32_1 = arith.constant 0 : i32
    return %arg0, %c0_i32, %c0_i32_0 : i32, i32, i32
  }
}

module attributes {stable_mosaic.version = 11 : i64} {
  func.func @kernel(%arg0: i32, %arg1: i32, %arg2: memref<2x4x128xf32, #tpu.memory_space<vmem>>, %arg3: memref<8x4xf32, #tpu.memory_space<vmem>>, %arg4: memref<8x1xf32, #tpu.memory_space<vmem>>, %arg5: memref<2x8x128xf32, #tpu.memory_space<vmem>>, %arg6: memref<1x8x1xf32, #tpu.memory_space<vmem>>, %arg7: memref<1x8x1xf32, #tpu.memory_space<vmem>>) attributes {dimension_semantics = [#tpu.dimension_semantics<parallel>, #tpu.dimension_semantics<arbitrary>], iteration_bounds = array<i64: 1, 1>, scalar_prefetch = 0 : i64, scratch_operands = 0 : i64, tpu.core_type = #tpu.core_type<tc>, window_params = [{transform_indices = @transform_0, window_bounds = array<i64: 2, 4, 128>}, {pipeline_mode = #tpu.pipeline_mode<synchronous>, transform_indices = @transform_1, window_bounds = array<i64: 8, 4>}, {pipeline_mode = #tpu.pipeline_mode<synchronous>, transform_indices = @transform_2, window_bounds = array<i64: 8, 1>}, {transform_indices = @transform_3, window_bounds = array<i64: 2, 8, 128>}, {transform_indices = @transform_4, window_bounds = array<i64: 1, 8, 1>}, {transform_indices = @transform_5, window_bounds = array<i64: 1, 8, 1>}]} {
    %c0_i32 = arith.constant 0 : i32
    %0 = arith.cmpi eq, %arg1, %c0_i32 : i32
    %1 = arith.extui %0 : i1 to i32
    %c0_i32_0 = arith.constant 0 : i32
    %2 = arith.cmpi ne, %1, %c0_i32_0 : i32
    scf.if %2 {
      %cst_38 = arith.constant 0.000000e+00 : f32
      %67 = vector.broadcast %cst_38 : f32 to vector<1x8x1xf32>
      %c0_39 = arith.constant 0 : index
      %c0_40 = arith.constant 0 : index
      %c0_41 = arith.constant 0 : index
      %68 = vector.load %arg6[%c0_39, %c0_40, %c0_41] : memref<1x8x1xf32, #tpu.memory_space<vmem>>, vector<1x8x1xf32>
      tpu.vector_store %arg6[%c0_39, %c0_40, %c0_41], %67 {strides = array<i32>} : memref<1x8x1xf32, #tpu.memory_space<vmem>>, vector<1x8x1xf32>,
      %cst_42 = arith.constant 0.000000e+00 : f32
      %69 = vector.broadcast %cst_42 : f32 to vector<1x8x1xf32>
      %c0_43 = arith.constant 0 : index
      %c0_44 = arith.constant 0 : index
      %c0_45 = arith.constant 0 : index
      %70 = vector.load %arg7[%c0_43, %c0_44, %c0_45] : memref<1x8x1xf32, #tpu.memory_space<vmem>>, vector<1x8x1xf32>
      tpu.vector_store %arg7[%c0_43, %c0_44, %c0_45], %69 {strides = array<i32>} : memref<1x8x1xf32, #tpu.memory_space<vmem>>, vector<1x8x1xf32>,
    } else {
    }
    %c0 = arith.constant 0 : index
    %c0_1 = arith.constant 0 : index
    %3 = vector.load %arg3[%c0, %c0_1] : memref<8x4xf32, #tpu.memory_space<vmem>>, vector<8x4xf32>
    %c0_2 = arith.constant 0 : index
    %c0_3 = arith.constant 0 : index
    %4 = vector.load %arg4[%c0_2, %c0_3] : memref<8x1xf32, #tpu.memory_space<vmem>>, vector<8x1xf32>
    %5 = tpu.iota {dimensions = array<i32: 1>} : vector<1x128xi32>
    %c128_i32 = arith.constant 128 : i32
    %6 = arith.muli %arg1, %c128_i32 : i32
    %7 = vector.broadcast %6 : i32 to vector<1x128xi32>
    %8 = arith.addi %7, %5 : vector<1x128xi32>
    %c16_i32 = arith.constant 16 : i32
    %9 = vector.broadcast %c16_i32 : i32 to vector<1x128xi32>
    %10 = arith.cmpi slt, %8, %9 : vector<1x128xi32>
    %cst = arith.constant 0.000000e+00 : f32
    %11 = vector.broadcast %cst : f32 to vector<8x1xf32>
    %cst_4 = arith.constant 0.000000e+00 : f32
    %12 = vector.broadcast %cst_4 : f32 to vector<8x1xf32>
    %c0_5 = arith.constant 0 : index
    %c0_6 = arith.constant 0 : index
    %c0_7 = arith.constant 0 : index
    %13 = vector.load %arg2[%c0_5, %c0_6, %c0_7] : memref<2x4x128xf32, #tpu.memory_space<vmem>>, vector<1x4x128xf32>
    %14 = vector.shape_cast %13 : vector<1x4x128xf32> to vector<4x128xf32>
    %cst_8 = arith.constant dense<0.000000e+00> : vector<8x128xf32>
    %15 = tpu.matmul %3, %14, %cst_8 {dimension_numbers = #tpu.dot_dimension_numbers<[1], [0], [0], [1], [0, 0, 1, 1], [], []>} : vector<8x4xf32>, vector<4x128xf32>, vector<8x128xf32> -> vector<8x128xf32>
    %16 = vector.broadcast %4 : vector<8x1xf32> to vector<8x128xf32>
    %17 = arith.addf %15, %16 : vector<8x128xf32>
    %cst_9 = arith.constant 0.000000e+00 : f32
    %18 = vector.broadcast %cst_9 : f32 to vector<8x128xf32>
    %19 = arith.maximumf %17, %18 : vector<8x128xf32>
    %c0_10 = arith.constant 0 : index
    %c0_11 = arith.constant 0 : index
    %c0_12 = arith.constant 0 : index
    %20 = vector.load %arg5[%c0_10, %c0_11, %c0_12] : memref<2x8x128xf32, #tpu.memory_space<vmem>>, vector<1x8x128xf32>
    %21 = vector.shape_cast %20 : vector<1x8x128xf32> to vector<8x128xf32>
    %22 = vector.shape_cast %19 : vector<8x128xf32> to vector<1x8x128xf32>
    tpu.vector_store %arg5[%c0_10, %c0_11, %c0_12], %22 {strides = array<i32>} : memref<2x8x128xf32, #tpu.memory_space<vmem>>, vector<1x8x128xf32>,
    %cst_13 = arith.constant 0.000000e+00 : f32
    %23 = vector.shape_cast %10 : vector<1x128xi1> to vector<1x128xi1>
    %24 = vector.broadcast %23 : vector<1x128xi1> to vector<8x128xi1>
    %25 = vector.broadcast %cst_13 : f32 to vector<8x128xf32>
    %26 = arith.select %24, %19, %25 : vector<8x128xi1>, vector<8x128xf32>
    %cst_14 = arith.constant dense<0.000000e+00> : vector<8xf32>
    %27 = vector.multi_reduction <add>, %26, %cst_14 [1] : vector<8x128xf32> to vector<8xf32>
    %28 = vector.shape_cast %27 : vector<8xf32> to vector<8x1xf32>
    %29 = arith.addf %11, %28 : vector<8x1xf32>
    %30 = arith.mulf %26, %26 : vector<8x128xf32>
    %cst_15 = arith.constant dense<0.000000e+00> : vector<8xf32>
    %31 = vector.multi_reduction <add>, %30, %cst_15 [1] : vector<8x128xf32> to vector<8xf32>
    %32 = vector.shape_cast %31 : vector<8xf32> to vector<8x1xf32>
    %33 = arith.addf %12, %32 : vector<8x1xf32>
    %c1 = arith.constant 1 : index
    %c0_16 = arith.constant 0 : index
    %c0_17 = arith.constant 0 : index
    %34 = vector.load %arg2[%c1, %c0_16, %c0_17] : memref<2x4x128xf32, #tpu.memory_space<vmem>>, vector<1x4x128xf32>
    %35 = vector.shape_cast %34 : vector<1x4x128xf32> to vector<4x128xf32>
    %cst_18 = arith.constant dense<0.000000e+00> : vector<8x128xf32>
    %36 = tpu.matmul %3, %35, %cst_18 {dimension_numbers = #tpu.dot_dimension_numbers<[1], [0], [0], [1], [0, 0, 1, 1], [], []>} : vector<8x4xf32>, vector<4x128xf32>, vector<8x128xf32> -> vector<8x128xf32>
    %37 = vector.broadcast %4 : vector<8x1xf32> to vector<8x128xf32>
    %38 = arith.addf %36, %37 : vector<8x128xf32>
    %cst_19 = arith.constant 0.000000e+00 : f32
    %39 = vector.broadcast %cst_19 : f32 to vector<8x128xf32>
    %40 = arith.maximumf %38, %39 : vector<8x128xf32>
    %c1_20 = arith.constant 1 : index
    %c0_21 = arith.constant 0 : index
    %c0_22 = arith.constant 0 : index
    %41 = vector.load %arg5[%c1_20, %c0_21, %c0_22] : memref<2x8x128xf32, #tpu.memory_space<vmem>>, vector<1x8x128xf32>
    %42 = vector.shape_cast %41 : vector<1x8x128xf32> to vector<8x128xf32>
    %43 = vector.shape_cast %40 : vector<8x128xf32> to vector<1x8x128xf32>
    tpu.vector_store %arg5[%c1_20, %c0_21, %c0_22], %43 {strides = array<i32>} : memref<2x8x128xf32, #tpu.memory_space<vmem>>, vector<1x8x128xf32>,
    %cst_23 = arith.constant 0.000000e+00 : f32
    %44 = vector.shape_cast %10 : vector<1x128xi1> to vector<1x128xi1>
    %45 = vector.broadcast %44 : vector<1x128xi1> to vector<8x128xi1>
    %46 = vector.broadcast %cst_23 : f32 to vector<8x128xf32>
    %47 = arith.select %45, %40, %46 : vector<8x128xi1>, vector<8x128xf32>
    %cst_24 = arith.constant dense<0.000000e+00> : vector<8xf32>
    %48 = vector.multi_reduction <add>, %47, %cst_24 [1] : vector<8x128xf32> to vector<8xf32>
    %49 = vector.shape_cast %48 : vector<8xf32> to vector<8x1xf32>
    %50 = arith.addf %29, %49 : vector<8x1xf32>
    %51 = arith.mulf %47, %47 : vector<8x128xf32>
    %cst_25 = arith.constant dense<0.000000e+00> : vector<8xf32>
    %52 = vector.multi_reduction <add>, %51, %cst_25 [1] : vector<8x128xf32> to vector<8xf32>
    %53 = vector.shape_cast %52 : vector<8xf32> to vector<8x1xf32>
    %54 = arith.addf %33, %53 : vector<8x1xf32>
    %c0_26 = arith.constant 0 : index
    %c0_27 = arith.constant 0 : index
    %c0_28 = arith.constant 0 : index
    %55 = vector.load %arg6[%c0_26, %c0_27, %c0_28] : memref<1x8x1xf32, #tpu.memory_space<vmem>>, vector<1x8x1xf32>
    %56 = vector.shape_cast %55 : vector<1x8x1xf32> to vector<8x1xf32>
    %57 = arith.addf %56, %50 : vector<8x1xf32>
    %c0_29 = arith.constant 0 : index
    %c0_30 = arith.constant 0 : index
    %c0_31 = arith.constant 0 : index
    %58 = vector.load %arg6[%c0_29, %c0_30, %c0_31] : memref<1x8x1xf32, #tpu.memory_space<vmem>>, vector<1x8x1xf32>
    %59 = vector.shape_cast %58 : vector<1x8x1xf32> to vector<8x1xf32>
    %60 = vector.shape_cast %57 : vector<8x1xf32> to vector<1x8x1xf32>
    tpu.vector_store %arg6[%c0_29, %c0_30, %c0_31], %60 {strides = array<i32>} : memref<1x8x1xf32, #tpu.memory_space<vmem>>, vector<1x8x1xf32>,
    %c0_32 = arith.constant 0 : index
    %c0_33 = arith.constant 0 : index
    %c0_34 = arith.constant 0 : index
    %61 = vector.load %arg7[%c0_32, %c0_33, %c0_34] : memref<1x8x1xf32, #tpu.memory_space<vmem>>, vector<1x8x1xf32>
    %62 = vector.shape_cast %61 : vector<1x8x1xf32> to vector<8x1xf32>
    %63 = arith.addf %62, %54 : vector<8x1xf32>
    %c0_35 = arith.constant 0 : index
    %c0_36 = arith.constant 0 : index
    %c0_37 = arith.constant 0 : index
    %64 = vector.load %arg7[%c0_35, %c0_36, %c0_37] : memref<1x8x1xf32, #tpu.memory_space<vmem>>, vector<1x8x1xf32>
    %65 = vector.shape_cast %64 : vector<1x8x1xf32> to vector<8x1xf32>
    %66 = vector.shape_cast %63 : vector<8x1xf32> to vector<1x8x1xf32>
    tpu.vector_store %arg7[%c0_35, %c0_36, %c0_37], %66 {strides = array<i32>} : memref<1x8x1xf32, #tpu.memory_space<vmem>>, vector<1x8x1xf32>,
    return
  }
  func.func @transform_0(%arg0: i32, %arg1: i32) -> (i32, i32, i32) {
    %c0_i32 = arith.constant 0 : i32
    %c0_i32_0 = arith.constant 0 : i32
    return %arg0, %c0_i32, %arg1 : i32, i32, i32
  }
  func.func @transform_1(%arg0: i32, %arg1: i32) -> (i32, i32) {
    %c0_i32 = arith.constant 0 : i32
    %c0_i32_0 = arith.constant 0 : i32
    %c0_i32_1 = arith.constant 0 : i32
    return %c0_i32, %c0_i32_0 : i32, i32
  }
  func.func @transform_2(%arg0: i32, %arg1: i32) -> (i32, i32) {
    %c0_i32 = arith.constant 0 : i32
    %c0_i32_0 = arith.constant 0 : i32
    %c0_i32_1 = arith.constant 0 : i32
    return %c0_i32, %c0_i32_0 : i32, i32
  }
  func.func @transform_3(%arg0: i32, %arg1: i32) -> (i32, i32, i32) {
    %c0_i32 = arith.constant 0 : i32
    %c0_i32_0 = arith.constant 0 : i32
    return %arg0, %c0_i32, %arg1 : i32, i32, i32
  }
  func.func @transform_4(%arg0: i32, %arg1: i32) -> (i32, i32, i32) {
    %c0_i32 = arith.constant 0 : i32
    %c0_i32_0 = arith.constant 0 : i32
    %c0_i32_1 = arith.constant 0 : i32
    return %arg0, %c0_i32, %c0_i32_0 : i32, i32, i32
  }
  func.func @transform_5(%arg0: i32, %arg1: i32) -> (i32, i32, i32) {
    %c0_i32 = arith.constant 0 : i32
    %c0_i32_0 = arith.constant 0 : i32
    %c0_i32_1 = arith.constant 0 : i32
    return %arg0, %c0_i32, %c0_i32_0 : i32, i32, i32
  }
}

module attributes {stable_mosaic.version = 11 : i64} {
  func.func @kernel(%arg0: i32, %arg1: i32, %arg2: memref<2x8x128xf32, #tpu.memory_space<vmem>>, %arg3: memref<8x8xf32, #tpu.memory_space<vmem>>, %arg4: memref<8x1xf32, #tpu.memory_space<vmem>>, %arg5: memref<2x8x128xf32, #tpu.memory_space<vmem>>, %arg6: memref<1x8x1xf32, #tpu.memory_space<vmem>>, %arg7: memref<1x8x1xf32, #tpu.memory_space<vmem>>) attributes {dimension_semantics = [#tpu.dimension_semantics<parallel>, #tpu.dimension_semantics<arbitrary>], iteration_bounds = array<i64: 1, 1>, scalar_prefetch = 0 : i64, scratch_operands = 0 : i64, tpu.core_type = #tpu.core_type<tc>, window_params = [{transform_indices = @transform_0, window_bounds = array<i64: 2, 8, 128>}, {pipeline_mode = #tpu.pipeline_mode<synchronous>, transform_indices = @transform_1, window_bounds = array<i64: 8, 8>}, {pipeline_mode = #tpu.pipeline_mode<synchronous>, transform_indices = @transform_2, window_bounds = array<i64: 8, 1>}, {transform_indices = @transform_3, window_bounds = array<i64: 2, 8, 128>}, {transform_indices = @transform_4, window_bounds = array<i64: 1, 8, 1>}, {transform_indices = @transform_5, window_bounds = array<i64: 1, 8, 1>}]} {
    %c0_i32 = arith.constant 0 : i32
    %0 = arith.cmpi eq, %arg1, %c0_i32 : i32
    %1 = arith.extui %0 : i1 to i32
    %c0_i32_0 = arith.constant 0 : i32
    %2 = arith.cmpi ne, %1, %c0_i32_0 : i32
    scf.if %2 {
      %cst_38 = arith.constant 0.000000e+00 : f32
      %67 = vector.broadcast %cst_38 : f32 to vector<1x8x1xf32>
      %c0_39 = arith.constant 0 : index
      %c0_40 = arith.constant 0 : index
      %c0_41 = arith.constant 0 : index
      %68 = vector.load %arg6[%c0_39, %c0_40, %c0_41] : memref<1x8x1xf32, #tpu.memory_space<vmem>>, vector<1x8x1xf32>
      tpu.vector_store %arg6[%c0_39, %c0_40, %c0_41], %67 {strides = array<i32>} : memref<1x8x1xf32, #tpu.memory_space<vmem>>, vector<1x8x1xf32>,
      %cst_42 = arith.constant 0.000000e+00 : f32
      %69 = vector.broadcast %cst_42 : f32 to vector<1x8x1xf32>
      %c0_43 = arith.constant 0 : index
      %c0_44 = arith.constant 0 : index
      %c0_45 = arith.constant 0 : index
      %70 = vector.load %arg7[%c0_43, %c0_44, %c0_45] : memref<1x8x1xf32, #tpu.memory_space<vmem>>, vector<1x8x1xf32>
      tpu.vector_store %arg7[%c0_43, %c0_44, %c0_45], %69 {strides = array<i32>} : memref<1x8x1xf32, #tpu.memory_space<vmem>>, vector<1x8x1xf32>,
    } else {
    }
    %c0 = arith.constant 0 : index
    %c0_1 = arith.constant 0 : index
    %3 = vector.load %arg3[%c0, %c0_1] : memref<8x8xf32, #tpu.memory_space<vmem>>, vector<8x8xf32>
    %c0_2 = arith.constant 0 : index
    %c0_3 = arith.constant 0 : index
    %4 = vector.load %arg4[%c0_2, %c0_3] : memref<8x1xf32, #tpu.memory_space<vmem>>, vector<8x1xf32>
    %5 = tpu.iota {dimensions = array<i32: 1>} : vector<1x128xi32>
    %c128_i32 = arith.constant 128 : i32
    %6 = arith.muli %arg1, %c128_i32 : i32
    %7 = vector.broadcast %6 : i32 to vector<1x128xi32>
    %8 = arith.addi %7, %5 : vector<1x128xi32>
    %c16_i32 = arith.constant 16 : i32
    %9 = vector.broadcast %c16_i32 : i32 to vector<1x128xi32>
    %10 = arith.cmpi slt, %8, %9 : vector<1x128xi32>
    %cst = arith.constant 0.000000e+00 : f32
    %11 = vector.broadcast %cst : f32 to vector<8x1xf32>
    %cst_4 = arith.constant 0.000000e+00 : f32
    %12 = vector.broadcast %cst_4 : f32 to vector<8x1xf32>
    %c0_5 = arith.constant 0 : index
    %c0_6 = arith.constant 0 : index
    %c0_7 = arith.constant 0 : index
    %13 = vector.load %arg2[%c0_5, %c0_6, %c0_7] : memref<2x8x128xf32, #tpu.memory_space<vmem>>, vector<1x8x128xf32>
    %14 = vector.shape_cast %13 : vector<1x8x128xf32> to vector<8x128xf32>
    %cst_8 = arith.constant dense<0.000000e+00> : vector<8x128xf32>
    %15 = tpu.matmul %3, %14, %cst_8 {dimension_numbers = #tpu.dot_dimension_numbers<[1], [0], [0], [1], [0, 0, 1, 1], [], []>} : vector<8x8xf32>, vector<8x128xf32>, vector<8x128xf32> -> vector<8x128xf32>
    %16 = vector.broadcast %4 : vector<8x1xf32> to vector<8x128xf32>
    %17 = arith.addf %15, %16 : vector<8x128xf32>
    %cst_9 = arith.constant 0.000000e+00 : f32
    %18 = vector.broadcast %cst_9 : f32 to vector<8x128xf32>
    %19 = arith.maximumf %17, %18 : vector<8x128xf32>
    %c0_10 = arith.constant 0 : index
    %c0_11 = arith.constant 0 : index
    %c0_12 = arith.constant 0 : index
    %20 = vector.load %arg5[%c0_10, %c0_11, %c0_12] : memref<2x8x128xf32, #tpu.memory_space<vmem>>, vector<1x8x128xf32>
    %21 = vector.shape_cast %20 : vector<1x8x128xf32> to vector<8x128xf32>
    %22 = vector.shape_cast %19 : vector<8x128xf32> to vector<1x8x128xf32>
    tpu.vector_store %arg5[%c0_10, %c0_11, %c0_12], %22 {strides = array<i32>} : memref<2x8x128xf32, #tpu.memory_space<vmem>>, vector<1x8x128xf32>,
    %cst_13 = arith.constant 0.000000e+00 : f32
    %23 = vector.shape_cast %10 : vector<1x128xi1> to vector<1x128xi1>
    %24 = vector.broadcast %23 : vector<1x128xi1> to vector<8x128xi1>
    %25 = vector.broadcast %cst_13 : f32 to vector<8x128xf32>
    %26 = arith.select %24, %19, %25 : vector<8x128xi1>, vector<8x128xf32>
    %cst_14 = arith.constant dense<0.000000e+00> : vector<8xf32>
    %27 = vector.multi_reduction <add>, %26, %cst_14 [1] : vector<8x128xf32> to vector<8xf32>
    %28 = vector.shape_cast %27 : vector<8xf32> to vector<8x1xf32>
    %29 = arith.addf %11, %28 : vector<8x1xf32>
    %30 = arith.mulf %26, %26 : vector<8x128xf32>
    %cst_15 = arith.constant dense<0.000000e+00> : vector<8xf32>
    %31 = vector.multi_reduction <add>, %30, %cst_15 [1] : vector<8x128xf32> to vector<8xf32>
    %32 = vector.shape_cast %31 : vector<8xf32> to vector<8x1xf32>
    %33 = arith.addf %12, %32 : vector<8x1xf32>
    %c1 = arith.constant 1 : index
    %c0_16 = arith.constant 0 : index
    %c0_17 = arith.constant 0 : index
    %34 = vector.load %arg2[%c1, %c0_16, %c0_17] : memref<2x8x128xf32, #tpu.memory_space<vmem>>, vector<1x8x128xf32>
    %35 = vector.shape_cast %34 : vector<1x8x128xf32> to vector<8x128xf32>
    %cst_18 = arith.constant dense<0.000000e+00> : vector<8x128xf32>
    %36 = tpu.matmul %3, %35, %cst_18 {dimension_numbers = #tpu.dot_dimension_numbers<[1], [0], [0], [1], [0, 0, 1, 1], [], []>} : vector<8x8xf32>, vector<8x128xf32>, vector<8x128xf32> -> vector<8x128xf32>
    %37 = vector.broadcast %4 : vector<8x1xf32> to vector<8x128xf32>
    %38 = arith.addf %36, %37 : vector<8x128xf32>
    %cst_19 = arith.constant 0.000000e+00 : f32
    %39 = vector.broadcast %cst_19 : f32 to vector<8x128xf32>
    %40 = arith.maximumf %38, %39 : vector<8x128xf32>
    %c1_20 = arith.constant 1 : index
    %c0_21 = arith.constant 0 : index
    %c0_22 = arith.constant 0 : index
    %41 = vector.load %arg5[%c1_20, %c0_21, %c0_22] : memref<2x8x128xf32, #tpu.memory_space<vmem>>, vector<1x8x128xf32>
    %42 = vector.shape_cast %41 : vector<1x8x128xf32> to vector<8x128xf32>
    %43 = vector.shape_cast %40 : vector<8x128xf32> to vector<1x8x128xf32>
    tpu.vector_store %arg5[%c1_20, %c0_21, %c0_22], %43 {strides = array<i32>} : memref<2x8x128xf32, #tpu.memory_space<vmem>>, vector<1x8x128xf32>,
    %cst_23 = arith.constant 0.000000e+00 : f32
    %44 = vector.shape_cast %10 : vector<1x128xi1> to vector<1x128xi1>
    %45 = vector.broadcast %44 : vector<1x128xi1> to vector<8x128xi1>
    %46 = vector.broadcast %cst_23 : f32 to vector<8x128xf32>
    %47 = arith.select %45, %40, %46 : vector<8x128xi1>, vector<8x128xf32>
    %cst_24 = arith.constant dense<0.000000e+00> : vector<8xf32>
    %48 = vector.multi_reduction <add>, %47, %cst_24 [1] : vector<8x128xf32> to vector<8xf32>
    %49 = vector.shape_cast %48 : vector<8xf32> to vector<8x1xf32>
    %50 = arith.addf %29, %49 : vector<8x1xf32>
    %51 = arith.mulf %47, %47 : vector<8x128xf32>
    %cst_25 = arith.constant dense<0.000000e+00> : vector<8xf32>
    %52 = vector.multi_reduction <add>, %51, %cst_25 [1] : vector<8x128xf32> to vector<8xf32>
    %53 = vector.shape_cast %52 : vector<8xf32> to vector<8x1xf32>
    %54 = arith.addf %33, %53 : vector<8x1xf32>
    %c0_26 = arith.constant 0 : index
    %c0_27 = arith.constant 0 : index
    %c0_28 = arith.constant 0 : index
    %55 = vector.load %arg6[%c0_26, %c0_27, %c0_28] : memref<1x8x1xf32, #tpu.memory_space<vmem>>, vector<1x8x1xf32>
    %56 = vector.shape_cast %55 : vector<1x8x1xf32> to vector<8x1xf32>
    %57 = arith.addf %56, %50 : vector<8x1xf32>
    %c0_29 = arith.constant 0 : index
    %c0_30 = arith.constant 0 : index
    %c0_31 = arith.constant 0 : index
    %58 = vector.load %arg6[%c0_29, %c0_30, %c0_31] : memref<1x8x1xf32, #tpu.memory_space<vmem>>, vector<1x8x1xf32>
    %59 = vector.shape_cast %58 : vector<1x8x1xf32> to vector<8x1xf32>
    %60 = vector.shape_cast %57 : vector<8x1xf32> to vector<1x8x1xf32>
    tpu.vector_store %arg6[%c0_29, %c0_30, %c0_31], %60 {strides = array<i32>} : memref<1x8x1xf32, #tpu.memory_space<vmem>>, vector<1x8x1xf32>,
    %c0_32 = arith.constant 0 : index
    %c0_33 = arith.constant 0 : index
    %c0_34 = arith.constant 0 : index
    %61 = vector.load %arg7[%c0_32, %c0_33, %c0_34] : memref<1x8x1xf32, #tpu.memory_space<vmem>>, vector<1x8x1xf32>
    %62 = vector.shape_cast %61 : vector<1x8x1xf32> to vector<8x1xf32>
    %63 = arith.addf %62, %54 : vector<8x1xf32>
    %c0_35 = arith.constant 0 : index
    %c0_36 = arith.constant 0 : index
    %c0_37 = arith.constant 0 : index
    %64 = vector.load %arg7[%c0_35, %c0_36, %c0_37] : memref<1x8x1xf32, #tpu.memory_space<vmem>>, vector<1x8x1xf32>
    %65 = vector.shape_cast %64 : vector<1x8x1xf32> to vector<8x1xf32>
    %66 = vector.shape_cast %63 : vector<8x1xf32> to vector<1x8x1xf32>
    tpu.vector_store %arg7[%c0_35, %c0_36, %c0_37], %66 {strides = array<i32>} : memref<1x8x1xf32, #tpu.memory_space<vmem>>, vector<1x8x1xf32>,
    return
  }
  func.func @transform_0(%arg0: i32, %arg1: i32) -> (i32, i32, i32) {
    %c0_i32 = arith.constant 0 : i32
    %c0_i32_0 = arith.constant 0 : i32
    return %arg0, %c0_i32, %arg1 : i32, i32, i32
  }
  func.func @transform_1(%arg0: i32, %arg1: i32) -> (i32, i32) {
    %c0_i32 = arith.constant 0 : i32
    %c0_i32_0 = arith.constant 0 : i32
    %c0_i32_1 = arith.constant 0 : i32
    return %c0_i32, %c0_i32_0 : i32, i32
  }
  func.func @transform_2(%arg0: i32, %arg1: i32) -> (i32, i32) {
    %c0_i32 = arith.constant 0 : i32
    %c0_i32_0 = arith.constant 0 : i32
    %c0_i32_1 = arith.constant 0 : i32
    return %c0_i32, %c0_i32_0 : i32, i32
  }
  func.func @transform_3(%arg0: i32, %arg1: i32) -> (i32, i32, i32) {
    %c0_i32 = arith.constant 0 : i32
    %c0_i32_0 = arith.constant 0 : i32
    return %arg0, %c0_i32, %arg1 : i32, i32, i32
  }
  func.func @transform_4(%arg0: i32, %arg1: i32) -> (i32, i32, i32) {
    %c0_i32 = arith.constant 0 : i32
    %c0_i32_0 = arith.constant 0 : i32
    %c0_i32_1 = arith.constant 0 : i32
    return %arg0, %c0_i32, %c0_i32_0 : i32, i32, i32
  }
  func.func @transform_5(%arg0: i32, %arg1: i32) -> (i32, i32, i32) {
    %c0_i32 = arith.constant 0 : i32
    %c0_i32_0 = arith.constant 0 : i32
    %c0_i32_1 = arith.constant 0 : i32
    return %arg0, %c0_i32, %c0_i32_0 : i32, i32, i32
  }
}

module attributes {stable_mosaic.version = 11 : i64} {
  func.func @_affine_kernel(%arg0: i32, %arg1: i32, %arg2: memref<2x8x128xf32, #tpu.memory_space<vmem>>, %arg3: memref<8x1xf32, #tpu.memory_space<vmem>>, %arg4: memref<8x1xf32, #tpu.memory_space<vmem>>, %arg5: memref<2x8x128xf32, #tpu.memory_space<vmem>>) attributes {dimension_semantics = [#tpu.dimension_semantics<parallel>, #tpu.dimension_semantics<parallel>], iteration_bounds = array<i64: 1, 1>, scalar_prefetch = 0 : i64, scratch_operands = 0 : i64, tpu.core_type = #tpu.core_type<tc>, window_params = [{transform_indices = @transform_0, window_bounds = array<i64: 2, 8, 128>}, {pipeline_mode = #tpu.pipeline_mode<synchronous>, transform_indices = @transform_1, window_bounds = array<i64: 8, 1>}, {pipeline_mode = #tpu.pipeline_mode<synchronous>, transform_indices = @transform_2, window_bounds = array<i64: 8, 1>}, {transform_indices = @transform_3, window_bounds = array<i64: 2, 8, 128>}]} {
    %c0 = arith.constant 0 : index
    %c0_0 = arith.constant 0 : index
    %c0_1 = arith.constant 0 : index
    %0 = vector.load %arg2[%c0, %c0_0, %c0_1] : memref<2x8x128xf32, #tpu.memory_space<vmem>>, vector<2x8x128xf32>
    %c0_2 = arith.constant 0 : index
    %c0_3 = arith.constant 0 : index
    %1 = vector.load %arg3[%c0_2, %c0_3] : memref<8x1xf32, #tpu.memory_space<vmem>>, vector<8x1xf32>
    %2 = vector.shape_cast %1 : vector<8x1xf32> to vector<1x8x1xf32>
    %3 = vector.broadcast %2 : vector<1x8x1xf32> to vector<2x8x128xf32>
    %4 = arith.mulf %0, %3 : vector<2x8x128xf32>
    %c0_4 = arith.constant 0 : index
    %c0_5 = arith.constant 0 : index
    %5 = vector.load %arg4[%c0_4, %c0_5] : memref<8x1xf32, #tpu.memory_space<vmem>>, vector<8x1xf32>
    %6 = vector.shape_cast %5 : vector<8x1xf32> to vector<1x8x1xf32>
    %7 = vector.broadcast %6 : vector<1x8x1xf32> to vector<2x8x128xf32>
    %8 = arith.addf %4, %7 : vector<2x8x128xf32>
    %c0_6 = arith.constant 0 : index
    %c0_7 = arith.constant 0 : index
    %c0_8 = arith.constant 0 : index
    %9 = vector.load %arg5[%c0_6, %c0_7, %c0_8] : memref<2x8x128xf32, #tpu.memory_space<vmem>>, vector<2x8x128xf32>
    tpu.vector_store %arg5[%c0_6, %c0_7, %c0_8], %8 {strides = array<i32>} : memref<2x8x128xf32, #tpu.memory_space<vmem>>, vector<2x8x128xf32>,
    return
  }
  func.func @transform_0(%arg0: i32, %arg1: i32) -> (i32, i32, i32) {
    %c0_i32 = arith.constant 0 : i32
    %c0_i32_0 = arith.constant 0 : i32
    return %arg0, %c0_i32, %arg1 : i32, i32, i32
  }
  func.func @transform_1(%arg0: i32, %arg1: i32) -> (i32, i32) {
    %c0_i32 = arith.constant 0 : i32
    %c0_i32_0 = arith.constant 0 : i32
    %c0_i32_1 = arith.constant 0 : i32
    return %c0_i32, %c0_i32_0 : i32, i32
  }
  func.func @transform_2(%arg0: i32, %arg1: i32) -> (i32, i32) {
    %c0_i32 = arith.constant 0 : i32
    %c0_i32_0 = arith.constant 0 : i32
    %c0_i32_1 = arith.constant 0 : i32
    return %c0_i32, %c0_i32_0 : i32, i32
  }
  func.func @transform_3(%arg0: i32, %arg1: i32) -> (i32, i32, i32) {
    %c0_i32 = arith.constant 0 : i32
    %c0_i32_0 = arith.constant 0 : i32
    return %arg0, %c0_i32, %arg1 : i32, i32, i32
  }
}

</mosaic_0001>

<llo_original>
// kernel: conv1d_block.5
$region0: #{conv1d_block.5}
  #allocation0 [shape = 'u32[]', space=smem, size = 0x4, offset = 0x4, fixed_abs, tag = 'smem constant byte address 0x4 - core index']
  #allocation1 [shape = 'u32[144,128]{1,0:T(1,128)}', space=vmem, size = 0x12000, scoped, tag = 'internal scratch']
  %s0 = inlined_call_operand.vmem [shape: f32[2,4,128], index: 0, kind: input, shape index: {}]
  %s1 = inlined_call_operand.vmem [shape: f32[1,4,1], index: 1, kind: output, shape index: {0}]
  %s2 = inlined_call_operand.vmem [shape: f32[1,4,1], index: 2, kind: output, shape index: {1}]
  %3 = xla_tuple %s1, %s2
  %s4 = sld [smem:[#allocation0]]
  $region26: #{conv1d_block.5} parent=0
    _
  %s6 = ssub.s32 1, %s4
  %s7 = scalar_select 0, %s6, %s4
  // Predicated region
  $region2: #{conv1d_block.5} parent=0 // pred_check
    _
  $region3: #{conv1d_block.5} parent=0 // pred_check_branch
    %9 = sbr.rel (0) target = $region5
  $region4: #{conv1d_block.5} parent=0 // pred_region
    _
  $region5: #{conv1d_block.5} parent=0 // pred_fallthru
    _
  %p10 = scmp.eq.s32.totalorder 0, 0
  // Predicated region
  $region6: #{conv1d_block.5} parent=0 // pred_check
    %p11 = pneg %p10
  $region7: #{conv1d_block.5} parent=0 // pred_check_branch
    %13 = sbr.rel (%p11) target = $region9
  $region8: #{conv1d_block.5} parent=0 // pred_region
    %vm14 = vcmask 3072
    %15 = vst.msk [vmem:[%s1] sm:$0xf] %vm14, 0.0
    %16 = vst.msk [vmem:[%s2] sm:$0xf] %vm14, 0.0
  $region9: #{conv1d_block.5} parent=0 // pred_fallthru
    _
  %v17 = vld [vmem:[%s0] sm:$0xf]
  %v18 = vld [vmem:[%s0 + $0x4] sm:$0xf]
  %vm19 = vcmask 1043456
  %v20 = vsel %vm19, %v17, 0.0
  %21 = vadd.xlane.f32.xlu0 %v20
  %v22 = vpop.xlane.xlu0 %21
  %v23 = vsel %vm19, %v18, 0.0
  %24 = vadd.xlane.f32.xlu0 %v23
  %v25 = vpop.xlane.xlu0 %24
  %v26 = vmul.f32 %v17, %v17
  %v27 = vmul.f32 %v18, %v18
  %v28 = vsel %vm19, %v26, 0.0
  %29 = vadd.xlane.f32.xlu0 %v28
  %v30 = vpop.xlane.xlu0 %29
  %v31 = vsel %vm19, %v27, 0.0
  %32 = vadd.xlane.f32.xlu0 %v31
  %v33 = vpop.xlane.xlu0 %32
  %v34 = vld [vmem:[%s1] sm:$0xf]
  %v35 = vsel %vm19, %v22, 0.0
  %v36 = vsel %vm19, %v25, 0.0
  %v37 = vadd.f32 %v35, %v36
  %v38 = vadd.f32 %v34, %v37
  %vm39 = vcmask 3072
  %40 = vst.msk [vmem:[%s1] sm:$0xf] %vm39, %v38
  %v41 = vld [vmem:[%s2] sm:$0xf]
  %v42 = vsel %vm19, %v30, 0.0
  %v43 = vsel %vm19, %v33, 0.0
  %v44 = vadd.f32 %v42, %v43
  %v45 = vadd.f32 %v41, %v44
  %46 = vst.msk [vmem:[%s2] sm:$0xf] %vm39, %v45
  // Predicated region
  $region10: #{conv1d_block.5} parent=0 // pred_check
    _
  $region11: #{conv1d_block.5} parent=0 // pred_check_branch
    %48 = sbr.rel (0) target = $region13
  $region12: #{conv1d_block.5} parent=0 // pred_region
    _
  $region13: #{conv1d_block.5} parent=0 // pred_fallthru
    _
  // Predicated region
  $region14: #{conv1d_block.5} parent=0 // pred_check
    _
  $region15: #{conv1d_block.5} parent=0 // pred_check_branch
    %50 = sbr.rel (0) target = $region17
  $region16: #{conv1d_block.5} parent=0 // pred_region
    _
  $region17: #{conv1d_block.5} parent=0 // pred_fallthru
    _
  // Predicated region
  $region18: #{conv1d_block.5} parent=0 // pred_check
    _
  $region19: #{conv1d_block.5} parent=0 // pred_check_branch
    %52 = sbr.rel (0) target = $region21
  $region20: #{conv1d_block.5} parent=0 // pred_region
    _
  $region21: #{conv1d_block.5} parent=0 // pred_fallthru
    _
  // Predicated region
  $region22: #{conv1d_block.5} parent=0 // pred_check
    _
  $region23: #{conv1d_block.5} parent=0 // pred_check_branch
    %54 = sbr.rel (0) target = $region25
  $region24: #{conv1d_block.5} parent=0 // pred_region
    _
  $region25: #{conv1d_block.5} parent=0 // pred_fallthru
    _

// kernel: conv1d_block.9
$region0: #{conv1d_block.9}
  #allocation0 [shape = 'u32[]', space=smem, size = 0x4, offset = 0x4, fixed_abs, tag = 'smem constant byte address 0x4 - core index']
  #allocation1 [shape = 'u32[144,128]{1,0:T(1,128)}', space=vmem, size = 0x12000, scoped, tag = 'internal scratch']
  %s0 = inlined_call_operand.vmem [shape: f32[2,8,128], index: 0, kind: input, shape index: {}]
  %s1 = inlined_call_operand.vmem [shape: f32[8,1], index: 1, kind: input, shape index: {}]
  %s2 = inlined_call_operand.vmem [shape: f32[8,1], index: 2, kind: input, shape index: {}]
  %s3 = inlined_call_operand.hbm [shape: f32[2,8,128], index: 3, kind: output, shape index: {}]
  %s4 = sld [smem:[#allocation0]]
  $region22: #{conv1d_block.9} parent=0
    _
  %s6 = ssub.s32 1, %s4
  %s7 = scalar_select 0, %s6, %s4
  $region1: #{conv1d_block.9} parent=0
    #allocation2 [shape = 'u8[8192]{0}', space=vmem, size = 0x2000, scoped, tag = 'output window, operand 0, single buffered']
    #allocation3 [shape = 's32[1]{0}', space=sflag, size = 0x4, scoped, tag = 'scoped memory for conv1d_block.9']
    %8 = vsyncpa [#allocation3], 0
    // Predicated region
    $region2: #{conv1d_block.9} parent=1 // pred_check
      _
    $region3: #{conv1d_block.9} parent=1 // pred_check_branch
      %10 = sbr.rel (0) target = $region5
    $region4: #{conv1d_block.9} parent=1 // pred_region
      _
    $region5: #{conv1d_block.9} parent=1 // pred_fallthru
      _
    // Predicated region
    $region6: #{conv1d_block.9} parent=1 // pred_check
      _
    $region7: #{conv1d_block.9} parent=1 // pred_check_branch
      %12 = sbr.rel (0) target = $region9
    $region8: #{conv1d_block.9} parent=1 // pred_region
      _
    $region9: #{conv1d_block.9} parent=1 // pred_fallthru
      _
    // Predicated region
    $region10: #{conv1d_block.9} parent=1 // pred_check
      _
    $region11: #{conv1d_block.9} parent=1 // pred_check_branch
      %14 = sbr.rel (0) target = $region13
    $region12: #{conv1d_block.9} parent=1 // pred_region
      _
    $region13: #{conv1d_block.9} parent=1 // pred_fallthru
      _
    %v15 = vld [vmem:[%s0] sm:$0xff]
    %v16 = vld [vmem:[%s0 + $0x8] sm:$0xff]
    %v17 = vld [vmem:[%s1] sm:$0xff]
    %19 = vset.pattern.permute.xlu0 0
    %20 = vperm.xlu0 %19, %v17
    %v21 = vpop.permute.xlu0 %20
    %v23 = vmul.f32 %v15, %v21
    %v24 = vmul.f32 %v16, %v21
    %v25 = vld [vmem:[%s2] sm:$0xff]
    %27 = vset.pattern.permute.xlu0 0
    %28 = vperm.xlu0 %27, %v25
    %v29 = vpop.permute.xlu0 %28
    %v31 = vadd.f32 %v23, %v29
    %v32 = vadd.f32 %v24, %v29
    %33 = vst [vmem:[#allocation2] sm:$0xff] %v31
    %34 = vst [vmem:[#allocation2 + $0x8] sm:$0xff] %v32
    // Predicated region
    $region14: #{conv1d_block.9} parent=1 // pred_check
      _
    $region15: #{conv1d_block.9} parent=1 // pred_check_branch
      %36 = sbr.rel (0) target = $region17
    $region16: #{conv1d_block.9} parent=1 // pred_region
      %s38 = ssub.s32 256, 256
      %39 = vsyncadd [#allocation3], %s38
      %s40 = sshll.u32 [#allocation2], 4
      %s41 = int_to_ptr.vmem [resolvable:$true] %s40
      %46 = dma.vmem_to_hbm [thread:$0]  %s41, 256, %s3, [#allocation3], 128, 128, 8
    $region17: #{conv1d_block.9} parent=1 // pred_fallthru
      _
    // Predicated region
    $region18: #{conv1d_block.9} parent=1 // pred_check
      _
    $region19: #{conv1d_block.9} parent=1 // pred_check_branch
      %48 = sbr.rel (0) target = $region21
    $region20: #{conv1d_block.9} parent=1 // pred_region
      %49 = dma.done [#allocation3], 256
    $region21: #{conv1d_block.9} parent=1 // pred_fallthru
      _
    %50 = vsyncpa [#allocation3], 1

// kernel: conv1d_block.6
$region0: #{conv1d_block.6}
  #allocation0 [shape = 'u32[]', space=smem, size = 0x4, offset = 0x4, fixed_abs, tag = 'smem constant byte address 0x4 - core index']
  #allocation1 [shape = 'u32[144,128]{1,0:T(1,128)}', space=vmem, size = 0x12000, scoped, tag = 'internal scratch']
  %s0 = inlined_call_operand.vmem [shape: f32[2,4,128], index: 0, kind: input, shape index: {}]
  %s1 = inlined_call_operand.vmem [shape: f32[8,4], index: 1, kind: input, shape index: {}]
  %s2 = inlined_call_operand.vmem [shape: f32[8,1], index: 2, kind: input, shape index: {}]
  %s3 = inlined_call_operand.vmem [shape: f32[2,8,128], index: 3, kind: output, shape index: {0}]
  %s4 = inlined_call_operand.vmem [shape: f32[1,8,1], index: 4, kind: output, shape index: {1}]
  %s5 = inlined_call_operand.vmem [shape: f32[1,8,1], index: 5, kind: output, shape index: {2}]
  %6 = xla_tuple %s3, %s4, %s5
  %s7 = sld [smem:[#allocation0]]
  $region42: #{conv1d_block.6} parent=0
    _
  %s9 = ssub.s32 1, %s7
  %s10 = scalar_select 0, %s9, %s7
  // Predicated region
  $region2: #{conv1d_block.6} parent=0 // pred_check
    _
  $region3: #{conv1d_block.6} parent=0 // pred_check_branch
    %12 = sbr.rel (0) target = $region5
  $region4: #{conv1d_block.6} parent=0 // pred_region
    _
  $region5: #{conv1d_block.6} parent=0 // pred_fallthru
    _
  // Predicated region
  $region6: #{conv1d_block.6} parent=0 // pred_check
    _
  $region7: #{conv1d_block.6} parent=0 // pred_check_branch
    %14 = sbr.rel (0) target = $region9
  $region8: #{conv1d_block.6} parent=0 // pred_region
    _
  $region9: #{conv1d_block.6} parent=0 // pred_fallthru
    _
  // Predicated region
  $region10: #{conv1d_block.6} parent=0 // pred_check
    _
  $region11: #{conv1d_block.6} parent=0 // pred_check_branch
    %16 = sbr.rel (0) target = $region13
  $region12: #{conv1d_block.6} parent=0 // pred_region
    _
  $region13: #{conv1d_block.6} parent=0 // pred_fallthru
    _
  %p17 = scmp.eq.s32.totalorder 0, 0
  // Predicated region
  $region14: #{conv1d_block.6} parent=0 // pred_check
    %p18 = pneg %p17
  $region15: #{conv1d_block.6} parent=0 // pred_check_branch
    %20 = sbr.rel (%p18) target = $region17
  $region16: #{conv1d_block.6} parent=0 // pred_region
    %vm21 = vcmask 7168
    %22 = vst.msk [vmem:[%s4] sm:$0xff] %vm21, 0.0
    %23 = vst.msk [vmem:[%s5] sm:$0xff] %vm21, 0.0
  $region17: #{conv1d_block.6} parent=0 // pred_fallthru
    _
  %v24 = vld [vmem:[%s1] sm:$0xff]
  %v25 = vld [vmem:[%s2] sm:$0xff]
  %v26 = vlaneseq
  %v27 = vand.u32 %v26, 127
  %s28 = smul.u32 0, 128
  %v29 = vstv %s28
  %v30 = vadd.s32 %v29, %v27
  %vm31 = vcmp.lt.s32.totalorder %v30, 16
  %v32 = vld [vmem:[%s0] sm:$0xf]
  %34 = vset.pattern.permute.xlu0 0
  %35 = vperm.xlu0 %34, %v25
  %v36 = vpop.permute.xlu0 %35
  %vm38 = vcmask 31744
  %v40 = vsel %vm38, %v24, 0
  %vm42 = vcmask 1043456
  %v44 = vsel %vm42, %v32, 0
  %46 = vmatprep.subr.mxu0 0.0
  %47 = vmatpush1.msra.mxu0 %v44
  %48 = vmatprep.subr.mxu0 0.0
  %49 = vmatpush1.msra.mxu0 0.0
  %50 = vmatprep.subr.mxu0 0.0
  %51 = vmatpush1.msra.mxu0 0.0
  %52 = vmatprep.subr.mxu0 0.0
  %53 = vmatpush1.msra.mxu0 0.0
  %54 = vmatprep.subr.mxu0 0.0
  %55 = vmatpush1.msra.mxu0 0.0
  %56 = vmatprep.subr.mxu0 0.0
  %57 = vmatpush1.msra.mxu0 0.0
  %58 = vmatprep.subr.mxu0 0.0
  %59 = vmatpush1.msra.mxu0 0.0
  %60 = vmatprep.subr.mxu0 0.0
  %61 = vmatpush1.msra.mxu0 0.0
  %62 = vmatprep.subr.mxu0 0.0
  %63 = vmatpush1.msra.mxu0 0.0
  %64 = vmatprep.subr.mxu0 0.0
  %65 = vmatpush1.msra.mxu0 0.0
  %66 = vmatprep.subr.mxu0 0.0
  %67 = vmatpush1.msra.mxu0 0.0
  %68 = vmatprep.subr.mxu0 0.0
  %69 = vmatpush1.msra.mxu0 0.0
  %70 = vmatprep.subr.mxu0 0.0
  %71 = vmatpush1.msra.mxu0 0.0
  %72 = vmatprep.subr.mxu0 0.0
  %73 = vmatpush1.msra.mxu0 0.0
  %74 = vmatprep.subr.mxu0 0.0
  %75 = vmatpush1.msra.mxu0 0.0
  %76 = vmatprep.subr.mxu0 0.0
  %77 = vmatpush1.msra.mxu0 0.0
  %78 = vmatprep.subr.mxu0 0.0
  %79 = vmatpush1.msra.mxu0 0.0
  %80 = vmatprep.subr.mxu0 0.0
  %81 = vmatpush1.msra.mxu0 0.0
  %82 = vmatprep.subr.mxu0 0.0
  %83 = vmatpush1.msra.mxu0 0.0
  %84 = vmatprep.subr.mxu0 0.0
  %85 = vmatpush1.msra.mxu0 0.0
  %86 = vmatprep.subr.mxu0 0.0
  %87 = vmatpush1.msra.mxu0 0.0
  %88 = vmatprep.subr.mxu0 0.0
  %89 = vmatpush1.msra.mxu0 0.0
  %90 = vmatprep.subr.mxu0 0.0
  %91 = vmatpush1.msra.mxu0 0.0
  %92 = vmatprep.subr.mxu0 0.0
  %93 = vmatpush1.msra.mxu0 0.0
  %94 = vmatprep.subr.mxu0 0.0
  %95 = vmatpush1.msra.mxu0 0.0
  %96 = vmatprep.subr.mxu0 0.0
  %97 = vmatpush1.msra.mxu0 0.0
  %98 = vmatprep.subr.mxu0 0.0
  %99 = vmatpush1.msra.mxu0 0.0
  %100 = vmatprep.subr.mxu0 0.0
  %101 = vmatpush1.msra.mxu0 0.0
  %102 = vmatprep.subr.mxu0 0.0
  %103 = vmatpush1.msra.mxu0 0.0
  %104 = vmatprep.subr.mxu0 0.0
  %105 = vmatpush1.msra.mxu0 0.0
  %106 = vmatprep.subr.mxu0 0.0
  %107 = vmatpush1.msra.mxu0 0.0
  %108 = vmatprep.subr.mxu0 0.0
  %109 = vmatpush1.msra.mxu0 0.0
  %110 = vmatprep.mubr.f32.mxu0 0.0
  %111 = vmatmul.mubr.f32.gmra.mrb[0].mxu0 %v40
  %v112 = vpop.f32.mrb[0].mxu0
  %v113 = vadd.f32 %v36, %v112
  %v114 = vpop.f32.mrb[0].mxu0
  %115 = vdwg.mxu0
  %v116 = vmax.f32 %v113, 0.0
  %117 = vst [vmem:[%s3] sm:$0xff] %v116
  %v118 = vsel %vm31, 1, 0
  %vm119 = vcmp.eq.s32.totalorder %v118, 1
  %v120 = vsel %vm119, %v116, 0.0
  %121 = vadd.xlane.f32.xlu0 %v120
  %v122 = vpop.xlane.xlu0 %121
  %v123 = vadd.f32 %v122, 0.0
  %v124 = vmul.f32 %v120, %v120
  %125 = vadd.xlane.f32.xlu0 %v124
  %v126 = vpop.xlane.xlu0 %125
  %v127 = vadd.f32 %v126, 0.0
  %s128 = scalar_lea.vmem %s0, 4
  %v129 = vld [vmem:[%s128] sm:$0xf]
  %v131 = vsel %vm42, %v129, 0
  %133 = vmatprep.subr.mxu0 0.0
  %134 = vmatpush1.msra.mxu0 %v131
  %135 = vmatprep.subr.mxu0 0.0
  %136 = vmatpush1.msra.mxu0 0.0
  %137 = vmatprep.subr.mxu0 0.0
  %138 = vmatpush1.msra.mxu0 0.0
  %139 = vmatprep.subr.mxu0 0.0
  %140 = vmatpush1.msra.mxu0 0.0
  %141 = vmatprep.subr.mxu0 0.0
  %142 = vmatpush1.msra.mxu0 0.0
  %143 = vmatprep.subr.mxu0 0.0
  %144 = vmatpush1.msra.mxu0 0.0
  %145 = vmatprep.subr.mxu0 0.0
  %146 = vmatpush1.msra.mxu0 0.0
  %147 = vmatprep.subr.mxu0 0.0
  %148 = vmatpush1.msra.mxu0 0.0
  %149 = vmatprep.subr.mxu0 0.0
  %150 = vmatpush1.msra.mxu0 0.0
  %151 = vmatprep.subr.mxu0 0.0
  %152 = vmatpush1.msra.mxu0 0.0
  %153 = vmatprep.subr.mxu0 0.0
  %154 = vmatpush1.msra.mxu0 0.0
  %155 = vmatprep.subr.mxu0 0.0
  %156 = vmatpush1.msra.mxu0 0.0
  %157 = vmatprep.subr.mxu0 0.0
  %158 = vmatpush1.msra.mxu0 0.0
  %159 = vmatprep.subr.mxu0 0.0
  %160 = vmatpush1.msra.mxu0 0.0
  %161 = vmatprep.subr.mxu0 0.0
  %162 = vmatpush1.msra.mxu0 0.0
  %163 = vmatprep.subr.mxu0 0.0
  %164 = vmatpush1.msra.mxu0 0.0
  %165 = vmatprep.subr.mxu0 0.0
  %166 = vmatpush1.msra.mxu0 0.0
  %167 = vmatprep.subr.mxu0 0.0
  %168 = vmatpush1.msra.mxu0 0.0
  %169 = vmatprep.subr.mxu0 0.0
  %170 = vmatpush1.msra.mxu0 0.0
  %171 = vmatprep.subr.mxu0 0.0
  %172 = vmatpush1.msra.mxu0 0.0
  %173 = vmatprep.subr.mxu0 0.0
  %174 = vmatpush1.msra.mxu0 0.0
  %175 = vmatprep.subr.mxu0 0.0
  %176 = vmatpush1.msra.mxu0 0.0
  %177 = vmatprep.subr.mxu0 0.0
  %178 = vmatpush1.msra.mxu0 0.0
  %179 = vmatprep.subr.mxu0 0.0
  %180 = vmatpush1.msra.mxu0 0.0
  %181 = vmatprep.subr.mxu0 0.0
  %182 = vmatpush1.msra.mxu0 0.0
  %183 = vmatprep.subr.mxu0 0.0
  %184 = vmatpush1.msra.mxu0 0.0
  %185 = vmatprep.subr.mxu0 0.0
  %186 = vmatpush1.msra.mxu0 0.0
  %187 = vmatprep.subr.mxu0 0.0
  %188 = vmatpush1.msra.mxu0 0.0
  %189 = vmatprep.subr.mxu0 0.0
  %190 = vmatpush1.msra.mxu0 0.0
  %191 = vmatprep.subr.mxu0 0.0
  %192 = vmatpush1.msra.mxu0 0.0
  %193 = vmatprep.subr.mxu0 0.0
  %194 = vmatpush1.msra.mxu0 0.0
  %195 = vmatprep.subr.mxu0 0.0
  %196 = vmatpush1.msra.mxu0 0.0
  %197 = vmatprep.mubr.f32.mxu0 0.0
  %198 = vmatmul.mubr.f32.gmra.mrb[0].mxu0 %v40
  %v199 = vpop.f32.mrb[0].mxu0
  %v200 = vadd.f32 %v36, %v199
  %v201 = vpop.f32.mrb[0].mxu0
  %202 = vdwg.mxu0
  %v203 = vmax.f32 %v200, 0.0
  %s204 = scalar_lea.vmem %s3, 8
  %205 = vst [vmem:[%s204] sm:$0xff] %v203
  %v206 = vsel %vm119, %v203, 0.0
  %207 = vadd.xlane.f32.xlu0 %v206
  %v208 = vpop.xlane.xlu0 %207
  %v209 = vadd.f32 %v123, %v208
  %v210 = vmul.f32 %v206, %v206
  %211 = vadd.xlane.f32.xlu0 %v210
  %v212 = vpop.xlane.xlu0 %211
  %v213 = vadd.f32 %v127, %v212
  %v214 = vld [vmem:[%s4] sm:$0xff]
  %v215 = vadd.f32 %v214, %v209
  %vm216 = vcmask 7168
  %217 = vst.msk [vmem:[%s4] sm:$0xff] %vm216, %v215
  %v218 = vld [vmem:[%s5] sm:$0xff]
  %v219 = vadd.f32 %v218, %v213
  %220 = vst.msk [vmem:[%s5] sm:$0xff] %vm216, %v219
  // Predicated region
  $region18: #{conv1d_block.6} parent=0 // pred_check
    _
  $region19: #{conv1d_block.6} parent=0 // pred_check_branch
    %222 = sbr.rel (0) target = $region21
  $region20: #{conv1d_block.6} parent=0 // pred_region
    _
  $region21: #{conv1d_block.6} parent=0 // pred_fallthru
    _
  // Predicated region
  $region22: #{conv1d_block.6} parent=0 // pred_check
    _
  $region23: #{conv1d_block.6} parent=0 // pred_check_branch
    %224 = sbr.rel (0) target = $region25
  $region24: #{conv1d_block.6} parent=0 // pred_region
    _
  $region25: #{conv1d_block.6} parent=0 // pred_fallthru
    _
  // Predicated region
  $region26: #{conv1d_block.6} parent=0 // pred_check
    _
  $region27: #{conv1d_block.6} parent=0 // pred_check_branch
    %226 = sbr.rel (0) target = $region29
  $region28: #{conv1d_block.6} parent=0 // pred_region
    _
  $region29: #{conv1d_block.6} parent=0 // pred_fallthru
    _
  // Predicated region
  $region30: #{conv1d_block.6} parent=0 // pred_check
    _
  $region31: #{conv1d_block.6} parent=0 // pred_check_branch
    %228 = sbr.rel (0) target = $region33
  $region32: #{conv1d_block.6} parent=0 // pred_region
    _
  $region33: #{conv1d_block.6} parent=0 // pred_fallthru
    _
  // Predicated region
  $region34: #{conv1d_block.6} parent=0 // pred_check
    _
  $region35: #{conv1d_block.6} parent=0 // pred_check_branch
    %230 = sbr.rel (0) target = $region37
  $region36: #{conv1d_block.6} parent=0 // pred_region
    _
  $region37: #{conv1d_block.6} parent=0 // pred_fallthru
    _
  // Predicated region
  $region38: #{conv1d_block.6} parent=0 // pred_check
    _
  $region39: #{conv1d_block.6} parent=0 // pred_check_branch
    %232 = sbr.rel (0) target = $region41
  $region40: #{conv1d_block.6} parent=0 // pred_region
    _
  $region41: #{conv1d_block.6} parent=0 // pred_fallthru
    _

// kernel: conv1d_block.7
$region0: #{conv1d_block.7}
  #allocation0 [shape = 'u32[]', space=smem, size = 0x4, offset = 0x4, fixed_abs, tag = 'smem constant byte address 0x4 - core index']
  #allocation1 [shape = 'u32[144,128]{1,0:T(1,128)}', space=vmem, size = 0x12000, scoped, tag = 'internal scratch']
  %s0 = inlined_call_operand.vmem [shape: f32[2,8,128], index: 0, kind: input, shape index: {}]
  %s1 = inlined_call_operand.vmem [shape: f32[8,8], index: 1, kind: input, shape index: {}]
  %s2 = inlined_call_operand.vmem [shape: f32[8,1], index: 2, kind: input, shape index: {}]
  %s3 = inlined_call_operand.vmem [shape: f32[2,8,128], index: 3, kind: output, shape index: {0}]
  %s4 = inlined_call_operand.vmem [shape: f32[1,8,1], index: 4, kind: output, shape index: {1}]
  %s5 = inlined_call_operand.vmem [shape: f32[1,8,1], index: 5, kind: output, shape index: {2}]
  %6 = xla_tuple %s3, %s4, %s5
  %s7 = sld [smem:[#allocation0]]
  $region42: #{conv1d_block.7} parent=0
    _
  %s9 = ssub.s32 1, %s7
  %s10 = scalar_select 0, %s9, %s7
  // Predicated region
  $region2: #{conv1d_block.7} parent=0 // pred_check
    _
  $region3: #{conv1d_block.7} parent=0 // pred_check_branch
    %12 = sbr.rel (0) target = $region5
  $region4: #{conv1d_block.7} parent=0 // pred_region
    _
  $region5: #{conv1d_block.7} parent=0 // pred_fallthru
    _
  // Predicated region
  $region6: #{conv1d_block.7} parent=0 // pred_check
    _
  $region7: #{conv1d_block.7} parent=0 // pred_check_branch
    %14 = sbr.rel (0) target = $region9
  $region8: #{conv1d_block.7} parent=0 // pred_region
    _
  $region9: #{conv1d_block.7} parent=0 // pred_fallthru
    _
  // Predicated region
  $region10: #{conv1d_block.7} parent=0 // pred_check
    _
  $region11: #{conv1d_block.7} parent=0 // pred_check_branch
    %16 = sbr.rel (0) target = $region13
  $region12: #{conv1d_block.7} parent=0 // pred_region
    _
  $region13: #{conv1d_block.7} parent=0 // pred_fallthru
    _
  %p17 = scmp.eq.s32.totalorder 0, 0
  // Predicated region
  $region14: #{conv1d_block.7} parent=0 // pred_check
    %p18 = pneg %p17
  $region15: #{conv1d_block.7} parent=0 // pred_check_branch
    %20 = sbr.rel (%p18) target = $region17
  $region16: #{conv1d_block.7} parent=0 // pred_region
    %vm21 = vcmask 7168
    %22 = vst.msk [vmem:[%s4] sm:$0xff] %vm21, 0.0
    %23 = vst.msk [vmem:[%s5] sm:$0xff] %vm21, 0.0
  $region17: #{conv1d_block.7} parent=0 // pred_fallthru
    _
  %v24 = vld [vmem:[%s1] sm:$0xff]
  %v25 = vld [vmem:[%s2] sm:$0xff]
  %v26 = vlaneseq
  %v27 = vand.u32 %v26, 127
  %s28 = smul.u32 0, 128
  %v29 = vstv %s28
  %v30 = vadd.s32 %v29, %v27
  %vm31 = vcmp.lt.s32.totalorder %v30, 16
  %v32 = vld [vmem:[%s0] sm:$0xff]
  %34 = vset.pattern.permute.xlu0 0
  %35 = vperm.xlu0 %34, %v25
  %v36 = vpop.permute.xlu0 %35
  %vm38 = vcmask 64512
  %v40 = vsel %vm38, %v24, 0
  %42 = vmatprep.subr.mxu0 0.0
  %43 = vmatpush1.msra.mxu0 %v32
  %44 = vmatprep.subr.mxu0 0.0
  %45 = vmatpush1.msra.mxu0 0.0
  %46 = vmatprep.subr.mxu0 0.0
  %47 = vmatpush1.msra.mxu0 0.0
  %48 = vmatprep.subr.mxu0 0.0
  %49 = vmatpush1.msra.mxu0 0.0
  %50 = vmatprep.subr.mxu0 0.0
  %51 = vmatpush1.msra.mxu0 0.0
  %52 = vmatprep.subr.mxu0 0.0
  %53 = vmatpush1.msra.mxu0 0.0
  %54 = vmatprep.subr.mxu0 0.0
  %55 = vmatpush1.msra.mxu0 0.0
  %56 = vmatprep.subr.mxu0 0.0
  %57 = vmatpush1.msra.mxu0 0.0
  %58 = vmatprep.subr.mxu0 0.0
  %59 = vmatpush1.msra.mxu0 0.0
  %60 = vmatprep.subr.mxu0 0.0
  %61 = vmatpush1.msra.mxu0 0.0
  %62 = vmatprep.subr.mxu0 0.0
  %63 = vmatpush1.msra.mxu0 0.0
  %64 = vmatprep.subr.mxu0 0.0
  %65 = vmatpush1.msra.mxu0 0.0
  %66 = vmatprep.subr.mxu0 0.0
  %67 = vmatpush1.msra.mxu0 0.0
  %68 = vmatprep.subr.mxu0 0.0
  %69 = vmatpush1.msra.mxu0 0.0
  %70 = vmatprep.subr.mxu0 0.0
  %71 = vmatpush1.msra.mxu0 0.0
  %72 = vmatprep.subr.mxu0 0.0
  %73 = vmatpush1.msra.mxu0 0.0
  %74 = vmatprep.subr.mxu0 0.0
  %75 = vmatpush1.msra.mxu0 0.0
  %76 = vmatprep.subr.mxu0 0.0
  %77 = vmatpush1.msra.mxu0 0.0
  %78 = vmatprep.subr.mxu0 0.0
  %79 = vmatpush1.msra.mxu0 0.0
  %80 = vmatprep.subr.mxu0 0.0
  %81 = vmatpush1.msra.mxu0 0.0
  %82 = vmatprep.subr.mxu0 0.0
  %83 = vmatpush1.msra.mxu0 0.0
  %84 = vmatprep.subr.mxu0 0.0
  %85 = vmatpush1.msra.mxu0 0.0
  %86 = vmatprep.subr.mxu0 0.0
  %87 = vmatpush1.msra.mxu0 0.0
  %88 = vmatprep.subr.mxu0 0.0
  %89 = vmatpush1.msra.mxu0 0.0
  %90 = vmatprep.subr.mxu0 0.0
  %91 = vmatpush1.msra.mxu0 0.0
  %92 = vmatprep.subr.mxu0 0.0
  %93 = vmatpush1.msra.mxu0 0.0
  %94 = vmatprep.subr.mxu0 0.0
  %95 = vmatpush1.msra.mxu0 0.0
  %96 = vmatprep.subr.mxu0 0.0
  %97 = vmatpush1.msra.mxu0 0.0
  %98 = vmatprep.subr.mxu0 0.0
  %99 = vmatpush1.msra.mxu0 0.0
  %100 = vmatprep.subr.mxu0 0.0
  %101 = vmatpush1.msra.mxu0 0.0
  %102 = vmatprep.subr.mxu0 0.0
  %103 = vmatpush1.msra.mxu0 0.0
  %104 = vmatprep.subr.mxu0 0.0
  %105 = vmatpush1.msra.mxu0 0.0
  %106 = vmatprep.mubr.f32.mxu0 0.0
  %107 = vmatmul.mubr.f32.gmra.mrb[0].mxu0 %v40
  %v108 = vpop.f32.mrb[0].mxu0
  %v109 = vadd.f32 %v36, %v108
  %v110 = vpop.f32.mrb[0].mxu0
  %111 = vdwg.mxu0
  %v112 = vmax.f32 %v109, 0.0
  %113 = vst [vmem:[%s3] sm:$0xff] %v112
  %v114 = vsel %vm31, 1, 0
  %vm115 = vcmp.eq.s32.totalorder %v114, 1
  %v116 = vsel %vm115, %v112, 0.0
  %117 = vadd.xlane.f32.xlu0 %v116
  %v118 = vpop.xlane.xlu0 %117
  %v119 = vadd.f32 %v118, 0.0
  %v120 = vmul.f32 %v116, %v116
  %121 = vadd.xlane.f32.xlu0 %v120
  %v122 = vpop.xlane.xlu0 %121
  %v123 = vadd.f32 %v122, 0.0
  %s124 = scalar_lea.vmem %s0, 8
  %v125 = vld [vmem:[%s124] sm:$0xff]
  %126 = vmatprep.subr.mxu0 0.0
  %127 = vmatpush1.msra.mxu0 %v125
  %128 = vmatprep.subr.mxu0 0.0
  %129 = vmatpush1.msra.mxu0 0.0
  %130 = vmatprep.subr.mxu0 0.0
  %131 = vmatpush1.msra.mxu0 0.0
  %132 = vmatprep.subr.mxu0 0.0
  %133 = vmatpush1.msra.mxu0 0.0
  %134 = vmatprep.subr.mxu0 0.0
  %135 = vmatpush1.msra.mxu0 0.0
  %136 = vmatprep.subr.mxu0 0.0
  %137 = vmatpush1.msra.mxu0 0.0
  %138 = vmatprep.subr.mxu0 0.0
  %139 = vmatpush1.msra.mxu0 0.0
  %140 = vmatprep.subr.mxu0 0.0
  %141 = vmatpush1.msra.mxu0 0.0
  %142 = vmatprep.subr.mxu0 0.0
  %143 = vmatpush1.msra.mxu0 0.0
  %144 = vmatprep.subr.mxu0 0.0
  %145 = vmatpush1.msra.mxu0 0.0
  %146 = vmatprep.subr.mxu0 0.0
  %147 = vmatpush1.msra.mxu0 0.0
  %148 = vmatprep.subr.mxu0 0.0
  %149 = vmatpush1.msra.mxu0 0.0
  %150 = vmatprep.subr.mxu0 0.0
  %151 = vmatpush1.msra.mxu0 0.0
  %152 = vmatprep.subr.mxu0 0.0
  %153 = vmatpush1.msra.mxu0 0.0
  %154 = vmatprep.subr.mxu0 0.0
  %155 = vmatpush1.msra.mxu0 0.0
  %156 = vmatprep.subr.mxu0 0.0
  %157 = vmatpush1.msra.mxu0 0.0
  %158 = vmatprep.subr.mxu0 0.0
  %159 = vmatpush1.msra.mxu0 0.0
  %160 = vmatprep.subr.mxu0 0.0
  %161 = vmatpush1.msra.mxu0 0.0
  %162 = vmatprep.subr.mxu0 0.0
  %163 = vmatpush1.msra.mxu0 0.0
  %164 = vmatprep.subr.mxu0 0.0
  %165 = vmatpush1.msra.mxu0 0.0
  %166 = vmatprep.subr.mxu0 0.0
  %167 = vmatpush1.msra.mxu0 0.0
  %168 = vmatprep.subr.mxu0 0.0
  %169 = vmatpush1.msra.mxu0 0.0
  %170 = vmatprep.subr.mxu0 0.0
  %171 = vmatpush1.msra.mxu0 0.0
  %172 = vmatprep.subr.mxu0 0.0
  %173 = vmatpush1.msra.mxu0 0.0
  %174 = vmatprep.subr.mxu0 0.0
  %175 = vmatpush1.msra.mxu0 0.0
  %176 = vmatprep.subr.mxu0 0.0
  %177 = vmatpush1.msra.mxu0 0.0
  %178 = vmatprep.subr.mxu0 0.0
  %179 = vmatpush1.msra.mxu0 0.0
  %180 = vmatprep.subr.mxu0 0.0
  %181 = vmatpush1.msra.mxu0 0.0
  %182 = vmatprep.subr.mxu0 0.0
  %183 = vmatpush1.msra.mxu0 0.0
  %184 = vmatprep.subr.mxu0 0.0
  %185 = vmatpush1.msra.mxu0 0.0
  %186 = vmatprep.subr.mxu0 0.0
  %187 = vmatpush1.msra.mxu0 0.0
  %188 = vmatprep.subr.mxu0 0.0
  %189 = vmatpush1.msra.mxu0 0.0
  %190 = vmatprep.mubr.f32.mxu0 0.0
  %191 = vmatmul.mubr.f32.gmra.mrb[0].mxu0 %v40
  %v192 = vpop.f32.mrb[0].mxu0
  %v193 = vadd.f32 %v36, %v192
  %v194 = vpop.f32.mrb[0].mxu0
  %195 = vdwg.mxu0
  %v196 = vmax.f32 %v193, 0.0
  %s197 = scalar_lea.vmem %s3, 8
  %198 = vst [vmem:[%s197] sm:$0xff] %v196
  %v199 = vsel %vm115, %v196, 0.0
  %200 = vadd.xlane.f32.xlu0 %v199
  %v201 = vpop.xlane.xlu0 %200
  %v202 = vadd.f32 %v119, %v201
  %v203 = vmul.f32 %v199, %v199
  %204 = vadd.xlane.f32.xlu0 %v203
  %v205 = vpop.xlane.xlu0 %204
  %v206 = vadd.f32 %v123, %v205
  %v207 = vld [vmem:[%s4] sm:$0xff]
  %v208 = vadd.f32 %v207, %v202
  %vm209 = vcmask 7168
  %210 = vst.msk [vmem:[%s4] sm:$0xff] %vm209, %v208
  %v211 = vld [vmem:[%s5] sm:$0xff]
  %v212 = vadd.f32 %v211, %v206
  %213 = vst.msk [vmem:[%s5] sm:$0xff] %vm209, %v212
  // Predicated region
  $region18: #{conv1d_block.7} parent=0 // pred_check
    _
  $region19: #{conv1d_block.7} parent=0 // pred_check_branch
    %215 = sbr.rel (0) target = $region21
  $region20: #{conv1d_block.7} parent=0 // pred_region
    _
  $region21: #{conv1d_block.7} parent=0 // pred_fallthru
    _
  // Predicated region
  $region22: #{conv1d_block.7} parent=0 // pred_check
    _
  $region23: #{conv1d_block.7} parent=0 // pred_check_branch
    %217 = sbr.rel (0) target = $region25
  $region24: #{conv1d_block.7} parent=0 // pred_region
    _
  $region25: #{conv1d_block.7} parent=0 // pred_fallthru
    _
  // Predicated region
  $region26: #{conv1d_block.7} parent=0 // pred_check
    _
  $region27: #{conv1d_block.7} parent=0 // pred_check_branch
    %219 = sbr.rel (0) target = $region29
  $region28: #{conv1d_block.7} parent=0 // pred_region
    _
  $region29: #{conv1d_block.7} parent=0 // pred_fallthru
    _
  // Predicated region
  $region30: #{conv1d_block.7} parent=0 // pred_check
    _
  $region31: #{conv1d_block.7} parent=0 // pred_check_branch
    %221 = sbr.rel (0) target = $region33
  $region32: #{conv1d_block.7} parent=0 // pred_region
    _
  $region33: #{conv1d_block.7} parent=0 // pred_fallthru
    _
  // Predicated region
  $region34: #{conv1d_block.7} parent=0 // pred_check
    _
  $region35: #{conv1d_block.7} parent=0 // pred_check_branch
    %223 = sbr.rel (0) target = $region37
  $region36: #{conv1d_block.7} parent=0 // pred_region
    _
  $region37: #{conv1d_block.7} parent=0 // pred_fallthru
    _
  // Predicated region
  $region38: #{conv1d_block.7} parent=0 // pred_check
    _
  $region39: #{conv1d_block.7} parent=0 // pred_check_branch
    %225 = sbr.rel (0) target = $region41
  $region40: #{conv1d_block.7} parent=0 // pred_region
    _
  $region41: #{conv1d_block.7} parent=0 // pred_fallthru
    _

</llo_original>
